<compile_context>
chip_gen: v7x
topology: tpu7x:2x2x1
jax: 0.10.0
libtpu: 0.0.40
codegen_flags: <defaults>
</compile_context>

<pallas_src>
import jax
import jax.numpy as jnp
from jax.experimental import pallas as pl
from jax.experimental.pallas import tpu as pltpu

LANES = 128
SUBLANES = 8


def _linear_noise_tanh_kernel(w_ref, c_ref, x_ref, o_ref):
    # w_ref: SMEM (3,)          -- the 3 Linear weights
    # c_ref: SMEM (1,)          -- bias + noise, pre-folded on the host
    # x_ref: VMEM (3, TR, 128)  -- lane-dense feature planes
    # o_ref: VMEM (TR, 128)     -- lane-dense output tile
    x0 = x_ref[0]                       # (TR, 128) full-tile load
    x1 = x_ref[1]
    x2 = x_ref[2]
    # 3 unrolled scalar-broadcast multiply-adds on the VPU (no XLU reduce,
    # no MXU) plus the folded bias+noise scalar, then tanh on the EUP.
    a = w_ref[0] * x0 + w_ref[1] * x1 + w_ref[2] * x2 + c_ref[0]
    o_ref[...] = jnp.tanh(a)


def linear_noise_tanh(x, weight, bias, noise, *, block_rows=256):
    """x: (N, 3) f32, weight: (1, 3) f32, bias: (1,) f32, noise: (1, 1) f32.

    Returns (N, 1) = tanh(x @ weight.T + bias + noise).
    """
    n, f_in = x.shape
    assert f_in == 3 and weight.shape == (1, 3)

    # Scalars -> SMEM. Fold bias + noise once on the host (noise is a (1,1)
    # scalar broadcast, so this is exact).
    w_flat = weight.reshape(3).astype(jnp.float32)
    c = (bias.reshape(()) + noise.reshape(())).astype(jnp.float32).reshape(1)

    # Pad the batch up to a lane-dense (rows, 128) slab, rows a multiple of
    # the sublane count and of the per-step tile.
    rows = max(pl.cdiv(n, LANES), 1)
    rows = pl.cdiv(rows, SUBLANES) * SUBLANES
    tr = min(block_rows, rows)
    rows = pl.cdiv(rows, tr) * tr
    n_pad = rows * LANES

    # Feature-plane layout (3, rows, 128). The transpose is 3*N floats; at the
    # module's tested size this is trivial, and for a large-N producer the
    # (3, N) layout can be handed over directly to skip it.
    xt = x.astype(jnp.float32).T                       # (3, N)
    xt = jnp.pad(xt, ((0, 0), (0, n_pad - n)))
    x3 = xt.reshape(3, rows, LANES)

    out = pl.pallas_call(
        _linear_noise_tanh_kernel,
        out_shape=jax.ShapeDtypeStruct((rows, LANES), jnp.float32),
        grid=(rows // tr,),
        in_specs=[
            pl.BlockSpec(memory_space=pltpu.SMEM),               # weights (3,)
            pl.BlockSpec(memory_space=pltpu.SMEM),               # bias+noise (1,)
            pl.BlockSpec((3, tr, LANES), lambda i: (0, i, 0)),   # x planes
        ],
        out_specs=pl.BlockSpec((tr, LANES), lambda i: (i, 0)),
        compiler_params=pltpu.CompilerParams(
            dimension_semantics=("parallel",)),
    )(w_flat, c, x3)

    return out.reshape(n_pad)[:n].reshape(n, 1)


if __name__ == "__main__":
    key = jax.random.PRNGKey(0)
    k_x, k_w, k_b, k_n, k_x2 = jax.random.split(key, 5)

    # Module-implied shapes: x1 = randn(1, 3); Linear(3, 1).
    x1 = jax.random.normal(k_x, (1, 3), dtype=jnp.float32)

    # Deterministic "parameter init" mimicking torch.nn.Linear(3, 1):
    # uniform(-1/sqrt(fan_in), 1/sqrt(fan_in)).
    bound = 1.0 / (3.0 ** 0.5)
    weight = jax.random.uniform(k_w, (1, 3), minval=-bound, maxval=bound,
                                dtype=jnp.float32)
    bias = jax.random.uniform(k_b, (1,), minval=-bound, maxval=bound,
                              dtype=jnp.float32)

    # torch.randn(1, 1) equivalent, drawn deterministically on the host.
    noise = jax.random.normal(k_n, (1, 1), dtype=jnp.float32)

    # --- module-sized run (N = 1) ---
    out = linear_noise_tanh(x1, weight, bias, noise)
    out = jax.block_until_ready(out)
    ref = jnp.tanh(x1 @ weight.T + bias + noise)
    assert out.shape == (1, 1), out.shape
    assert jnp.allclose(out, ref, atol=1e-6), (out, ref)

    # --- small batched run to exercise the gridded / padded tile path ---
    xb = jax.random.normal(k_x2, (2000, 3), dtype=jnp.float32)
    out_b = linear_noise_tanh(xb, weight, bias, noise, block_rows=8)
    out_b = jax.block_until_ready(out_b)
    ref_b = jnp.tanh(xb @ weight.T + bias + noise)
    assert out_b.shape == (2000, 1), out_b.shape
    assert jnp.allclose(out_b, ref_b, atol=1e-6)

    print("KERNEL_OK")
</pallas_src>

<mosaic_0001>
module attributes {stable_mosaic.version = 11 : i64} {
  func.func @_linear_noise_tanh_kernel(%arg0: i32, %arg1: memref<3xf32, #tpu.memory_space<smem>>, %arg2: memref<1xf32, #tpu.memory_space<smem>>, %arg3: memref<3x8x128xf32, #tpu.memory_space<vmem>>, %arg4: memref<8x128xf32, #tpu.memory_space<vmem>>) attributes {dimension_semantics = [#tpu.dimension_semantics<parallel>], iteration_bounds = array<i64: 1>, scalar_prefetch = 0 : i64, scratch_operands = 0 : i64, tpu.core_type = #tpu.core_type<tc>, window_params = [{transform_indices = @transform_0, window_bounds = array<i64: 3>}, {transform_indices = @transform_1, window_bounds = array<i64: 1>}, {transform_indices = @transform_2, window_bounds = array<i64: 3, 8, 128>}, {transform_indices = @transform_3, window_bounds = array<i64: 8, 128>}]} {
    %c0 = arith.constant 0 : index
    %c0_0 = arith.constant 0 : index
    %c0_1 = arith.constant 0 : index
    %0 = vector.load %arg3[%c0, %c0_0, %c0_1] : memref<3x8x128xf32, #tpu.memory_space<vmem>>, vector<1x8x128xf32>
    %1 = vector.shape_cast %0 : vector<1x8x128xf32> to vector<8x128xf32>
    %c1 = arith.constant 1 : index
    %c0_2 = arith.constant 0 : index
    %c0_3 = arith.constant 0 : index
    %2 = vector.load %arg3[%c1, %c0_2, %c0_3] : memref<3x8x128xf32, #tpu.memory_space<vmem>>, vector<1x8x128xf32>
    %3 = vector.shape_cast %2 : vector<1x8x128xf32> to vector<8x128xf32>
    %c2 = arith.constant 2 : index
    %c0_4 = arith.constant 0 : index
    %c0_5 = arith.constant 0 : index
    %4 = vector.load %arg3[%c2, %c0_4, %c0_5] : memref<3x8x128xf32, #tpu.memory_space<vmem>>, vector<1x8x128xf32>
    %5 = vector.shape_cast %4 : vector<1x8x128xf32> to vector<8x128xf32>
    %c0_6 = arith.constant 0 : index
    %6 = memref.load %arg1[%c0_6] : memref<3xf32, #tpu.memory_space<smem>>
    %7 = vector.broadcast %6 : f32 to vector<8x128xf32>
    %8 = arith.mulf %7, %1 : vector<8x128xf32>
    %c1_7 = arith.constant 1 : index
    %9 = memref.load %arg1[%c1_7] : memref<3xf32, #tpu.memory_space<smem>>
    %10 = vector.broadcast %9 : f32 to vector<8x128xf32>
    %11 = arith.mulf %10, %3 : vector<8x128xf32>
    %12 = arith.addf %8, %11 : vector<8x128xf32>
    %c2_8 = arith.constant 2 : index
    %13 = memref.load %arg1[%c2_8] : memref<3xf32, #tpu.memory_space<smem>>
    %14 = vector.broadcast %13 : f32 to vector<8x128xf32>
    %15 = arith.mulf %14, %5 : vector<8x128xf32>
    %16 = arith.addf %12, %15 : vector<8x128xf32>
    %c0_9 = arith.constant 0 : index
    %17 = memref.load %arg2[%c0_9] : memref<1xf32, #tpu.memory_space<smem>>
    %18 = vector.broadcast %17 : f32 to vector<8x128xf32>
    %19 = arith.addf %16, %18 : vector<8x128xf32>
    %20 = math.tanh %19 : vector<8x128xf32>
    %c0_10 = arith.constant 0 : index
    %c0_11 = arith.constant 0 : index
    %21 = vector.load %arg4[%c0_10, %c0_11] : memref<8x128xf32, #tpu.memory_space<vmem>>, vector<8x128xf32>
    tpu.vector_store %arg4[%c0_10, %c0_11], %20 {strides = array<i32>} : memref<8x128xf32, #tpu.memory_space<vmem>>, vector<8x128xf32>,
    return
  }
  func.func @transform_0(%arg0: i32) -> i32 {
    %c0_i32 = arith.constant 0 : i32
    %c0_i32_0 = arith.constant 0 : i32
    return %c0_i32 : i32
  }
  func.func @transform_1(%arg0: i32) -> i32 {
    %c0_i32 = arith.constant 0 : i32
    %c0_i32_0 = arith.constant 0 : i32
    return %c0_i32 : i32
  }
  func.func @transform_2(%arg0: i32) -> (i32, i32, i32) {
    %c0_i32 = arith.constant 0 : i32
    %c0_i32_0 = arith.constant 0 : i32
    %c0_i32_1 = arith.constant 0 : i32
    return %c0_i32, %arg0, %c0_i32_0 : i32, i32, i32
  }
  func.func @transform_3(%arg0: i32) -> (i32, i32) {
    %c0_i32 = arith.constant 0 : i32
    %c0_i32_0 = arith.constant 0 : i32
    return %arg0, %c0_i32 : i32, i32
  }
}

</mosaic_0001>

<llo_original>
// kernel: tpu_custom_call.1
$region0: #{tpu_custom_call.1}
  #allocation0 [shape = 'u32[]', space=smem, size = 0x4, offset = 0x4, fixed_abs, tag = 'smem constant byte address 0x4 - core index']
  #allocation1 [shape = 'u32[144,128]{1,0:T(1,128)}', space=vmem, size = 0x12000, scoped, tag = 'internal scratch']
  #allocation2 [shape = 'f32[1]{0:T(128)S(6)}', space=smem, size = 0x200, scoped, tag = 'scoped memory for tpu_custom_call.1']
  %s0 = inlined_call_operand.vmem [shape: f32[3], index: 0, kind: input, shape index: {}]
  %s1 = inlined_call_operand.<no memory space> [shape: f32[1], index: 1, kind: input, shape index: {}]
  %s2 = inlined_call_operand.hbm [shape: f32[3,8,128], index: 2, kind: input, shape index: {}]
  %s3 = inlined_call_operand.hbm [shape: f32[8,128], index: 3, kind: output, shape index: {}]
  %s4 = sld [smem:[#allocation0]]
  $region30: #{tpu_custom_call.1} parent=0
    _
  %s6 = ssub.s32 1, %s4
  %s7 = scalar_select 0, %s6, %s4
  %8 = sst [smem:[#allocation2]] %s1
  $region1: #{tpu_custom_call.1} parent=0
    #allocation3 [shape = 'u8[512]{0}', space=smem, size = 0x200, scoped, tag = 'input window, operand 0, single buffered']
    #allocation4 [shape = 's32[1]{0}', space=sflag, size = 0x4, scoped, tag = 'scoped memory for tpu_custom_call.1']
    #allocation5 [shape = 's32[1]{0}', space=sflag, size = 0x4, scoped, tag = 'scoped memory for tpu_custom_call.1']
    #allocation6 [shape = 's32[1]{0}', space=sflag, size = 0x4, scoped, tag = 'scoped memory for tpu_custom_call.1']
    #allocation7 [shape = 'u8[12288]{0}', space=vmem, size = 0x3000, scoped, tag = 'input window, operand 2, single buffered']
    #allocation8 [shape = 'u8[4096]{0}', space=vmem, size = 0x1000, scoped, tag = 'output window, operand 0, single buffered']
    %9 = vsyncpa [#allocation6], 0
    %10 = vsyncpa [#allocation4], 0
    %11 = vsyncpa [#allocation5], 0
    // Predicated region
    $region2: #{tpu_custom_call.1} parent=1 // pred_check
      _
    $region3: #{tpu_custom_call.1} parent=1 // pred_check_branch
      %13 = sbr.rel (0) target = $region5
    $region4: #{tpu_custom_call.1} parent=1 // pred_region
      %s15 = ssub.s32 16, 16
      %16 = vsyncadd [#allocation6], %s15
      %s18 = sshll.u32 %s0, 4
      %s19 = int_to_ptr.vmem [resolvable:$true] %s18
      %21 = dma.vmem_to_smem %s19, 16, [#allocation3], [#allocation6]
    $region5: #{tpu_custom_call.1} parent=1 // pred_fallthru
      _
    // Predicated region
    $region6: #{tpu_custom_call.1} parent=1 // pred_check
      _
    $region7: #{tpu_custom_call.1} parent=1 // pred_check_branch
      %23 = sbr.rel (0) target = $region9
    $region8: #{tpu_custom_call.1} parent=1 // pred_region
      _
    $region9: #{tpu_custom_call.1} parent=1 // pred_fallthru
      _
    // Predicated region
    $region10: #{tpu_custom_call.1} parent=1 // pred_check
      _
    $region11: #{tpu_custom_call.1} parent=1 // pred_check_branch
      %25 = sbr.rel (0) target = $region13
    $region12: #{tpu_custom_call.1} parent=1 // pred_region
      %s27 = ssub.s32 384, 384
      %28 = vsyncadd [#allocation4], %s27
      %s29 = sshll.u32 [#allocation7], 4
      %s30 = int_to_ptr.vmem [resolvable:$true] %s29
      %35 = dma.hbm_to_vmem [thread:$0]  %s2, 384, %s30, [#allocation4], 128, 128, 8
    $region13: #{tpu_custom_call.1} parent=1 // pred_fallthru
      _
    // Predicated region
    $region14: #{tpu_custom_call.1} parent=1 // pred_check
      _
    $region15: #{tpu_custom_call.1} parent=1 // pred_check_branch
      %37 = sbr.rel (0) target = $region17
    $region16: #{tpu_custom_call.1} parent=1 // pred_region
      %38 = dma.done [#allocation6], 16
    $region17: #{tpu_custom_call.1} parent=1 // pred_fallthru
      _
    // Predicated region
    $region18: #{tpu_custom_call.1} parent=1 // pred_check
      _
    $region19: #{tpu_custom_call.1} parent=1 // pred_check_branch
      %40 = sbr.rel (0) target = $region21
    $region20: #{tpu_custom_call.1} parent=1 // pred_region
      %41 = dma.done [#allocation4], 384
    $region21: #{tpu_custom_call.1} parent=1 // pred_fallthru
      _
    %42 = sfence
    %v43 = vld [vmem:[#allocation7] sm:$0xff]
    %s44 = scalar_lea.vmem [#allocation7], 8
    %v45 = vld [vmem:[%s44] sm:$0xff]
    %s46 = scalar_lea.vmem [#allocation7], 16
    %v47 = vld [vmem:[%s46] sm:$0xff]
    %s48 = sld [smem:[#allocation3]]
    %v49 = vstv %s48
    %v50 = vmul.f32 %v49, %v43
    %s51 = sld [smem:[#allocation3 + $0x1]]
    %v52 = vstv %s51
    %v53 = vmul.f32 %v52, %v45
    %v54 = vadd.f32 %v50, %v53
    %s55 = sld [smem:[#allocation3 + $0x2]]
    %v56 = vstv %s55
    %v57 = vmul.f32 %v56, %v47
    %v58 = vadd.f32 %v54, %v57
    %s59 = sld [smem:[#allocation2]]
    %v60 = vstv %s59
    %v61 = vadd.f32 %v58, %v60
    %v62 = vtanh.pop %v61
    %63 = vst [vmem:[#allocation8] sm:$0xff] %v62
    // Predicated region
    $region22: #{tpu_custom_call.1} parent=1 // pred_check
      _
    $region23: #{tpu_custom_call.1} parent=1 // pred_check_branch
      %65 = sbr.rel (0) target = $region25
    $region24: #{tpu_custom_call.1} parent=1 // pred_region
      %s67 = ssub.s32 128, 128
      %68 = vsyncadd [#allocation5], %s67
      %s70 = sshll.u32 [#allocation8], 4
      %s71 = int_to_ptr.vmem [resolvable:$true] %s70
      %73 = dma.vmem_to_hbm [thread:$0]  %s71, 128, %s3, [#allocation5]
    $region25: #{tpu_custom_call.1} parent=1 // pred_fallthru
      _
    // Predicated region
    $region26: #{tpu_custom_call.1} parent=1 // pred_check
      _
    $region27: #{tpu_custom_call.1} parent=1 // pred_check_branch
      %75 = sbr.rel (0) target = $region29
    $region28: #{tpu_custom_call.1} parent=1 // pred_region
      %76 = dma.done [#allocation5], 128
    $region29: #{tpu_custom_call.1} parent=1 // pred_fallthru
      _
    %77 = vsyncpa [#allocation4], 1
    %78 = vsyncpa [#allocation5], 1
    %79 = vsyncpa [#allocation6], 1

</llo_original>
